<compile_context>
chip_gen: v6e
topology: v6e:2x2x1
jax: 0.10.0
libtpu: 0.0.40
codegen_flags: <defaults>
</compile_context>

<pallas_src>
import jax
import jax.numpy as jnp
from jax.experimental import pallas as pl
from jax.experimental.pallas import tpu as pltpu

NUM_DEP = 36                 # padding index (and the value -1 is remapped to)
VOCAB = NUM_DEP + 1          # 37 rows in the embedding table
LANES = 128
MAX_TILE_TOKENS = 8192       # upper bound on tokens per grid step (sweepable)
VMEM_BUDGET = 24 << 20       # per-step scoped-VMEM target, safe on v5e / v6e / v7x


def dep_emb_kernel(idx_ref, table_ref, out_ref):
    """Embed rows*128 tokens in one grid step.

    idx_ref:   (rows, 128) int32   lane-dense token indices
    table_ref: (VOCAB, F)          embedding table, row NUM_DEP zeroed
    out_ref:   (rows*128, F)       token-major output (contiguous HBM rows)
    """
    rows = idx_ref.shape[0]
    idx = idx_ref[...]
    idx = jnp.where(idx == -1, NUM_DEP, idx)                  # dep_mask[dep_mask == -1] = 36
    # NOTE: indices outside [-1, NUM_DEP] produce an all-zero embedding (PyTorch would
    # raise); acceptable for in-range inputs.
    iota = jax.lax.broadcasted_iota(jnp.int32, (rows, LANES, VOCAB), 2)
    onehot = (idx[:, :, None] == iota).astype(table_ref.dtype)
    onehot = onehot.reshape(rows * LANES, VOCAB)              # free leading-dim merge
    # Table row NUM_DEP is zero, so padding / `== 36` tokens embed to exactly 0.
    out_ref[...] = jnp.dot(
        onehot, table_ref[...], preferred_element_type=jnp.float32
    ).astype(out_ref.dtype)


def dependency_embedding(dep_mask, table, *, max_tile=MAX_TILE_TOKENS, out_dtype=None):
    """JAX/Pallas equivalent of DepedencyEmbedding.forward.

    out_dtype: pass jnp.bfloat16 to halve output HBM bytes (the kernel is
    output-HBM-bound); the one-hot row selection is exact, only the final cast rounds.
    """
    orig_shape = dep_mask.shape
    num_features = table.shape[1]
    out_dtype = table.dtype if out_dtype is None else out_dtype
    itemsize = jnp.dtype(out_dtype).itemsize

    # padding_idx=36 semantics: the padding row contributes zeros.
    # TODO(synk): hoist this tiny table prep out of the hot path if the table is static.
    table = table.at[NUM_DEP].set(0)

    flat = dep_mask.reshape(-1).astype(jnp.int32)
    n = flat.shape[0]
    r_total = pl.cdiv(n, LANES)                  # rows of 128 tokens

    # ---- tile selection from an explicit per-step VMEM budget ------------------
    lane_f = pl.cdiv(num_features, LANES) * LANES
    per_token = (2 * lane_f * itemsize           # output double-buffer (lane padded in VMEM)
                 + 2 * 4                         # dense (rows, 128) int32 idx double-buffer
                 + 2 * LANES * 4                 # one-hot (VOCAB lane-padded to 128) + slack
                 + lane_f * 4)                   # f32 matmul accumulator
    cap_rows = max(8, min(max_tile, VMEM_BUDGET // per_token) // LANES)
    if r_total < 16:
        rows = r_total                           # one block == the whole (small) input
    else:
        max_rows = max(8, (cap_rows // 8) * 8)
        n_steps = max(2, pl.cdiv(r_total, max_rows))   # >=2 steps: v7x 2-TC sharding
        rows = pl.cdiv(pl.cdiv(r_total, n_steps), 8) * 8
    grid_len = pl.cdiv(r_total, rows)
    r_pad = grid_len * rows
    n_pad = r_pad * LANES
    tile = rows * LANES

    flat = jnp.pad(flat, (0, n_pad - n), constant_values=NUM_DEP)
    idx2d = flat.reshape(r_pad, LANES)

    # Only raise the scoped-VMEM limit (never lower it below the 32 MiB v6e/v7x default).
    vmem_need = per_token * tile + (2 << 20)
    compiler_params = pltpu.CompilerParams(
        dimension_semantics=("parallel",),
        vmem_limit_bytes=int(max(vmem_need, 32 << 20)) if vmem_need > (12 << 20) else None,
    )

    out = pl.pallas_call(
        dep_emb_kernel,
        out_shape=jax.ShapeDtypeStruct((n_pad, num_features), out_dtype),
        grid_spec=pltpu.PrefetchScalarGridSpec(
            num_scalar_prefetch=0,
            grid=(grid_len,),
            in_specs=[
                pl.BlockSpec((rows, LANES), lambda i: (i, 0)),
                pl.BlockSpec((VOCAB, num_features), lambda i: (0, 0)),
            ],
            out_specs=pl.BlockSpec((tile, num_features), lambda i: (i, 0)),
        ),
        compiler_params=compiler_params,
    )(idx2d, table)
    # TODO(synk): for F<128 a lane-packed (n_pad*F//128, 128) output layout would make
    # every store unmasked; today the masked 32-lane stores hide behind the HBM write,
    # so the simple token-major layout is kept.
    # `out[:n]` is a no-op whenever n already equals the padded size.
    return out[:n].reshape(*orig_shape, num_features)


def reference(dep_mask, table):
    idx = jnp.where(dep_mask == -1, NUM_DEP, dep_mask).astype(jnp.int32)
    emb = table[idx]
    return jnp.where((idx == NUM_DEP)[..., None], 0.0, emb)


if __name__ == "__main__":
    key = jax.random.PRNGKey(0)

    checks = [
        (32, (2, 8, 8)),      # F < 128, 128 tokens  -> single tiny grid step
        (32, (4, 16, 16)),    # F < 128, 1024 tokens -> single 8-row step
        (128, (2, 8, 8)),     # F = 128
        (32, (8, 64, 64)),    # 32768 tokens         -> multi-step grid (tile 8192)
    ]
    for num_features, mask_shape in checks:
        k_tab, k_idx, key = jax.random.split(key, 3)
        # Deterministic "trained" embedding table; padding row zeroed like
        # nn.Embedding(padding_idx=36) init.
        table = jax.random.normal(k_tab, (VOCAB, num_features), dtype=jnp.float32)
        table = table.at[NUM_DEP].set(0.0)
        # dep_mask: dependency-label matrices with -1 padding (and some == 36)
        dep_mask = jax.random.randint(k_idx, mask_shape, -1, NUM_DEP + 1, dtype=jnp.int32)

        out = jax.block_until_ready(dependency_embedding(dep_mask, table))
        ref = reference(dep_mask, table)
        assert out.shape == (*mask_shape, num_features), out.shape
        assert jnp.allclose(out, ref, atol=1e-5, rtol=1e-5), (num_features, mask_shape)

    print("KERNEL_OK")
</pallas_src>

<mosaic_0001>
module attributes {stable_mosaic.version = 11 : i64} {
  func.func @dep_emb_kernel(%arg0: i32, %arg1: memref<1x128xi32, #tpu.memory_space<vmem>>, %arg2: memref<37x32xf32, #tpu.memory_space<vmem>>, %arg3: memref<128x32xf32, #tpu.memory_space<vmem>>) attributes {dimension_semantics = [#tpu.dimension_semantics<parallel>], iteration_bounds = array<i64: 1>, scalar_prefetch = 0 : i64, scratch_operands = 0 : i64, tpu.core_type = #tpu.core_type<tc>, window_params = [{transform_indices = @transform_0, window_bounds = array<i64: 1, 128>}, {pipeline_mode = #tpu.pipeline_mode<synchronous>, transform_indices = @transform_1, window_bounds = array<i64: 37, 32>}, {transform_indices = @transform_2, window_bounds = array<i64: 128, 32>}]} {
    %c0 = arith.constant 0 : index
    %c0_0 = arith.constant 0 : index
    %0 = vector.load %arg1[%c0, %c0_0] : memref<1x128xi32, #tpu.memory_space<vmem>>, vector<1x128xi32>
    %c-1_i32 = arith.constant -1 : i32
    %1 = vector.broadcast %c-1_i32 : i32 to vector<1x128xi32>
    %2 = arith.cmpi eq, %0, %1 : vector<1x128xi32>
    %c36_i32 = arith.constant 36 : i32
    %3 = vector.broadcast %c36_i32 : i32 to vector<1x128xi32>
    %4 = arith.select %2, %3, %0 : vector<1x128xi1>, vector<1x128xi32>
    %5 = tpu.iota {dimensions = array<i32: 2>} : vector<1x128x37xi32>
    %6 = vector.shape_cast %4 : vector<1x128xi32> to vector<1x128x1xi32>
    %7 = vector.broadcast %6 : vector<1x128x1xi32> to vector<1x128x37xi32>
    %8 = arith.cmpi eq, %7, %5 : vector<1x128x37xi32>
    %9 = arith.extui %8 : vector<1x128x37xi1> to vector<1x128x37xi32>
    %10 = arith.sitofp %9 : vector<1x128x37xi32> to vector<1x128x37xf32>
    %11 = vector.shape_cast %10 : vector<1x128x37xf32> to vector<128x37xf32>
    %c0_1 = arith.constant 0 : index
    %c0_2 = arith.constant 0 : index
    %12 = vector.load %arg2[%c0_1, %c0_2] : memref<37x32xf32, #tpu.memory_space<vmem>>, vector<37x32xf32>
    %cst = arith.constant dense<0.000000e+00> : vector<128x32xf32>
    %13 = tpu.matmul %11, %12, %cst {dimension_numbers = #tpu.dot_dimension_numbers<[1], [0], [0], [1], [0, 0, 1, 1], [], []>} : vector<128x37xf32>, vector<37x32xf32>, vector<128x32xf32> -> vector<128x32xf32>
    %c0_3 = arith.constant 0 : index
    %c0_4 = arith.constant 0 : index
    %14 = vector.load %arg3[%c0_3, %c0_4] : memref<128x32xf32, #tpu.memory_space<vmem>>, vector<128x32xf32>
    tpu.vector_store %arg3[%c0_3, %c0_4], %13 {strides = array<i32>} : memref<128x32xf32, #tpu.memory_space<vmem>>, vector<128x32xf32>,
    return
  }
  func.func @transform_0(%arg0: i32) -> (i32, i32) {
    %c0_i32 = arith.constant 0 : i32
    %c0_i32_0 = arith.constant 0 : i32
    return %arg0, %c0_i32 : i32, i32
  }
  func.func @transform_1(%arg0: i32) -> (i32, i32) {
    %c0_i32 = arith.constant 0 : i32
    %c0_i32_0 = arith.constant 0 : i32
    %c0_i32_1 = arith.constant 0 : i32
    return %c0_i32, %c0_i32_0 : i32, i32
  }
  func.func @transform_2(%arg0: i32) -> (i32, i32) {
    %c0_i32 = arith.constant 0 : i32
    %c0_i32_0 = arith.constant 0 : i32
    return %arg0, %c0_i32 : i32, i32
  }
}

</mosaic_0001>

<llo_original>
// kernel: tpu_custom_call.1
$region0: #{tpu_custom_call.1}
  #allocation0 [shape = 'u32[]', space=smem, size = 0x4, offset = 0x4, fixed_abs, tag = 'smem constant byte address 0x4 - core index']
  #allocation1 [shape = 'u32[144,128]{1,0:T(1,128)}', space=vmem, size = 0x12000, scoped, tag = 'internal scratch']
  %s0 = inlined_call_operand.vmem [shape: s32[1,128], index: 0, kind: input, shape index: {}]
  %s1 = inlined_call_operand.vmem [shape: f32[37,32], index: 1, kind: input, shape index: {}]
  %s2 = inlined_call_operand.vmem [shape: f32[128,32], index: 2, kind: output, shape index: {}]
  %s3 = sld [smem:[#allocation0]]
  $region18: #{tpu_custom_call.1} parent=0
    _
  %s5 = ssub.s32 1, %s3
  %s6 = scalar_select 0, %s5, %s3
  // Predicated region
  $region2: #{tpu_custom_call.1} parent=0 // pred_check
    _
  $region3: #{tpu_custom_call.1} parent=0 // pred_check_branch
    %8 = sbr.rel (0) target = $region5
  $region4: #{tpu_custom_call.1} parent=0 // pred_region
    _
  $region5: #{tpu_custom_call.1} parent=0 // pred_fallthru
    _
  // Predicated region
  $region6: #{tpu_custom_call.1} parent=0 // pred_check
    _
  $region7: #{tpu_custom_call.1} parent=0 // pred_check_branch
    %10 = sbr.rel (0) target = $region9
  $region8: #{tpu_custom_call.1} parent=0 // pred_region
    _
  $region9: #{tpu_custom_call.1} parent=0 // pred_fallthru
    _
  %v11 = vld [vmem:[%s0] sm:$0x1]
  %vm12 = vcmp.eq.s32.totalorder %v11, 4294967295
  %v13 = vsel %vm12, 36, %v11
  %v14 = vlaneseq
  %v15 = vand.u32 %v14, 127
  %v16 = vlaneseq
  %v17 = vshrl.u32 %v16, 7
  %v18 = vsub.s32 0, %v17
  %v19 = vrot.slane %v13, %v18
  %21 = vbcast.lane.b32.xlu0 %v19, 256
  %v22 = vpop.permute.xlu0 %21
  %s24 = sor.u32 256, 8
  %25 = vbcast.lane.b32.xlu0 %v19, %s24
  %v26 = vpop.permute.xlu0 %25
  %s28 = sor.u32 256, 16
  %29 = vbcast.lane.b32.xlu0 %v19, %s28
  %v30 = vpop.permute.xlu0 %29
  %s32 = sor.u32 256, 24
  %33 = vbcast.lane.b32.xlu0 %v19, %s32
  %v34 = vpop.permute.xlu0 %33
  %s36 = sor.u32 256, 32
  %37 = vbcast.lane.b32.xlu0 %v19, %s36
  %v38 = vpop.permute.xlu0 %37
  %s40 = sor.u32 256, 40
  %41 = vbcast.lane.b32.xlu0 %v19, %s40
  %v42 = vpop.permute.xlu0 %41
  %s44 = sor.u32 256, 48
  %45 = vbcast.lane.b32.xlu0 %v19, %s44
  %v46 = vpop.permute.xlu0 %45
  %s48 = sor.u32 256, 56
  %49 = vbcast.lane.b32.xlu0 %v19, %s48
  %v50 = vpop.permute.xlu0 %49
  %s52 = sor.u32 256, 64
  %53 = vbcast.lane.b32.xlu0 %v19, %s52
  %v54 = vpop.permute.xlu0 %53
  %s56 = sor.u32 256, 72
  %57 = vbcast.lane.b32.xlu0 %v19, %s56
  %v58 = vpop.permute.xlu0 %57
  %s60 = sor.u32 256, 80
  %61 = vbcast.lane.b32.xlu0 %v19, %s60
  %v62 = vpop.permute.xlu0 %61
  %s64 = sor.u32 256, 88
  %65 = vbcast.lane.b32.xlu0 %v19, %s64
  %v66 = vpop.permute.xlu0 %65
  %s68 = sor.u32 256, 96
  %69 = vbcast.lane.b32.xlu0 %v19, %s68
  %v70 = vpop.permute.xlu0 %69
  %s72 = sor.u32 256, 104
  %73 = vbcast.lane.b32.xlu0 %v19, %s72
  %v74 = vpop.permute.xlu0 %73
  %s76 = sor.u32 256, 112
  %77 = vbcast.lane.b32.xlu0 %v19, %s76
  %v78 = vpop.permute.xlu0 %77
  %s80 = sor.u32 256, 120
  %81 = vbcast.lane.b32.xlu0 %v19, %s80
  %v82 = vpop.permute.xlu0 %81
  %vm83 = vcmp.eq.s32.totalorder %v22, %v15
  %vm84 = vcmp.eq.s32.totalorder %v26, %v15
  %vm85 = vcmp.eq.s32.totalorder %v30, %v15
  %vm86 = vcmp.eq.s32.totalorder %v34, %v15
  %vm87 = vcmp.eq.s32.totalorder %v38, %v15
  %vm88 = vcmp.eq.s32.totalorder %v42, %v15
  %vm89 = vcmp.eq.s32.totalorder %v46, %v15
  %vm90 = vcmp.eq.s32.totalorder %v50, %v15
  %vm91 = vcmp.eq.s32.totalorder %v54, %v15
  %vm92 = vcmp.eq.s32.totalorder %v58, %v15
  %vm93 = vcmp.eq.s32.totalorder %v62, %v15
  %vm94 = vcmp.eq.s32.totalorder %v66, %v15
  %vm95 = vcmp.eq.s32.totalorder %v70, %v15
  %vm96 = vcmp.eq.s32.totalorder %v74, %v15
  %vm97 = vcmp.eq.s32.totalorder %v78, %v15
  %vm98 = vcmp.eq.s32.totalorder %v82, %v15
  %v99 = vsel %vm83, 1, 0
  %v100 = vsel %vm84, 1, 0
  %v101 = vsel %vm85, 1, 0
  %v102 = vsel %vm86, 1, 0
  %v103 = vsel %vm87, 1, 0
  %v104 = vsel %vm88, 1, 0
  %v105 = vsel %vm89, 1, 0
  %v106 = vsel %vm90, 1, 0
  %v107 = vsel %vm91, 1, 0
  %v108 = vsel %vm92, 1, 0
  %v109 = vsel %vm93, 1, 0
  %v110 = vsel %vm94, 1, 0
  %v111 = vsel %vm95, 1, 0
  %v112 = vsel %vm96, 1, 0
  %v113 = vsel %vm97, 1, 0
  %v114 = vsel %vm98, 1, 0
  %v115 = vcvt.s32.f32 %v99
  %v116 = vcvt.s32.f32 %v100
  %v117 = vcvt.s32.f32 %v101
  %v118 = vcvt.s32.f32 %v102
  %v119 = vcvt.s32.f32 %v103
  %v120 = vcvt.s32.f32 %v104
  %v121 = vcvt.s32.f32 %v105
  %v122 = vcvt.s32.f32 %v106
  %v123 = vcvt.s32.f32 %v107
  %v124 = vcvt.s32.f32 %v108
  %v125 = vcvt.s32.f32 %v109
  %v126 = vcvt.s32.f32 %v110
  %v127 = vcvt.s32.f32 %v111
  %v128 = vcvt.s32.f32 %v112
  %v129 = vcvt.s32.f32 %v113
  %v130 = vcvt.s32.f32 %v114
  %v131 = vld [vmem:[%s1] sm:$0xff]
  %v132 = vld [vmem:[%s1 + $0x8] sm:$0xff]
  %v133 = vld [vmem:[%s1 + $0x10] sm:$0xff]
  %v134 = vld [vmem:[%s1 + $0x18] sm:$0xff]
  %v135 = vld [vmem:[%s1 + $0x20] sm:$0x1f]
  %vm136 = vcmask 302080
  %v138 = vsel %vm136, %v115, 0
  %v141 = vsel %vm136, %v116, 0
  %v144 = vsel %vm136, %v117, 0
  %v147 = vsel %vm136, %v118, 0
  %v150 = vsel %vm136, %v119, 0
  %v153 = vsel %vm136, %v120, 0
  %v156 = vsel %vm136, %v121, 0
  %v159 = vsel %vm136, %v122, 0
  %v162 = vsel %vm136, %v123, 0
  %v165 = vsel %vm136, %v124, 0
  %v168 = vsel %vm136, %v125, 0
  %v171 = vsel %vm136, %v126, 0
  %v174 = vsel %vm136, %v127, 0
  %v177 = vsel %vm136, %v128, 0
  %v180 = vsel %vm136, %v129, 0
  %v183 = vsel %vm136, %v130, 0
  %vm185 = vcmask 1044480
  %v187 = vsel %vm185, %v135, 0
  %189 = vmatprep.subr.mxu0 0.0
  %190 = vmatpush1.msra.mxu0 0.0
  %191 = vmatprep.subr.mxu0 0.0
  %192 = vmatpush1.msra.mxu0 0.0
  %193 = vmatprep.subr.mxu0 0.0
  %194 = vmatpush1.msra.mxu0 0.0
  %195 = vmatprep.subr.mxu0 0.0
  %196 = vmatpush1.msra.mxu0 0.0
  %197 = vmatprep.subr.mxu0 0.0
  %198 = vmatpush1.msra.mxu0 0.0
  %199 = vmatprep.subr.mxu0 0.0
  %200 = vmatpush1.msra.mxu0 0.0
  %201 = vmatprep.subr.mxu0 0.0
  %202 = vmatpush1.msra.mxu0 0.0
  %203 = vmatprep.subr.mxu0 0.0
  %204 = vmatpush1.msra.mxu0 0.0
  %205 = vmatprep.subr.mxu0 0.0
  %206 = vmatpush1.msra.mxu0 0.0
  %207 = vmatprep.subr.mxu0 0.0
  %208 = vmatpush1.msra.mxu0 0.0
  %209 = vmatprep.subr.mxu0 0.0
  %210 = vmatpush1.msra.mxu0 0.0
  %211 = vmatprep.subr.mxu0 0.0
  %212 = vmatpush1.msra.mxu0 %v187
  %213 = vmatprep.subr.mxu0 0.0
  %214 = vmatpush1.msra.mxu0 %v134
  %215 = vmatprep.subr.mxu0 0.0
  %216 = vmatpush1.msra.mxu0 %v133
  %217 = vmatprep.subr.mxu0 0.0
  %218 = vmatpush1.msra.mxu0 %v132
  %219 = vmatprep.subr.mxu0 0.0
  %220 = vmatpush1.msra.mxu0 %v131
  %221 = vmatprep.subr.mxu0 0.0
  %222 = vmatpush2.msra.mxu0 0.0
  %223 = vmatprep.subr.mxu0 0.0
  %224 = vmatpush2.msra.mxu0 0.0
  %225 = vmatprep.subr.mxu0 0.0
  %226 = vmatpush2.msra.mxu0 0.0
  %227 = vmatprep.subr.mxu0 0.0
  %228 = vmatpush2.msra.mxu0 0.0
  %229 = vmatprep.subr.mxu0 0.0
  %230 = vmatpush2.msra.mxu0 0.0
  %231 = vmatprep.subr.mxu0 0.0
  %232 = vmatpush2.msra.mxu0 0.0
  %233 = vmatprep.subr.mxu0 0.0
  %234 = vmatpush2.msra.mxu0 0.0
  %235 = vmatprep.subr.mxu0 0.0
  %236 = vmatpush2.msra.mxu0 0.0
  %237 = vmatprep.subr.mxu0 0.0
  %238 = vmatpush2.msra.mxu0 0.0
  %239 = vmatprep.subr.mxu0 0.0
  %240 = vmatpush2.msra.mxu0 0.0
  %241 = vmatprep.subr.mxu0 0.0
  %242 = vmatpush2.msra.mxu0 0.0
  %243 = vmatprep.subr.mxu0 0.0
  %244 = vmatpush2.msra.mxu0 0.0
  %245 = vmatprep.subr.mxu0 0.0
  %246 = vmatpush2.msra.mxu0 0.0
  %247 = vmatprep.subr.mxu0 0.0
  %248 = vmatpush2.msra.mxu0 0.0
  %249 = vmatprep.subr.mxu0 0.0
  %250 = vmatpush2.msra.mxu0 0.0
  %251 = vmatprep.subr.mxu0 0.0
  %252 = vmatpush2.msra.mxu0 0.0
  %253 = vmatprep.mubr.f32.mxu0 0.0
  %254 = vmatmul.mubr.f32.gmra.mxu0 %v138
  %v255 = vpop.f32.mrf.mxu0
  %v256 = vadd.f32 0.0, %v255
  %v257 = vpop.f32.mrf.mxu0
  %258 = vmatprep.mubr.f32.mxu0 0.0
  %259 = vmatmul.mubr.f32.gmra.mxu0 %v141
  %v260 = vpop.f32.mrf.mxu0
  %v261 = vadd.f32 0.0, %v260
  %v262 = vpop.f32.mrf.mxu0
  %263 = vmatprep.mubr.f32.mxu0 0.0
  %264 = vmatmul.mubr.f32.gmra.mxu0 %v144
  %v265 = vpop.f32.mrf.mxu0
  %v266 = vadd.f32 0.0, %v265
  %v267 = vpop.f32.mrf.mxu0
  %268 = vmatprep.mubr.f32.mxu0 0.0
  %269 = vmatmul.mubr.f32.gmra.mxu0 %v147
  %v270 = vpop.f32.mrf.mxu0
  %v271 = vadd.f32 0.0, %v270
  %v272 = vpop.f32.mrf.mxu0
  %273 = vmatprep.mubr.f32.mxu0 0.0
  %274 = vmatmul.mubr.f32.gmra.mxu0 %v150
  %v275 = vpop.f32.mrf.mxu0
  %v276 = vadd.f32 0.0, %v275
  %v277 = vpop.f32.mrf.mxu0
  %278 = vmatprep.mubr.f32.mxu0 0.0
  %279 = vmatmul.mubr.f32.gmra.mxu0 %v153
  %v280 = vpop.f32.mrf.mxu0
  %v281 = vadd.f32 0.0, %v280
  %v282 = vpop.f32.mrf.mxu0
  %283 = vmatprep.mubr.f32.mxu0 0.0
  %284 = vmatmul.mubr.f32.gmra.mxu0 %v156
  %v285 = vpop.f32.mrf.mxu0
  %v286 = vadd.f32 0.0, %v285
  %v287 = vpop.f32.mrf.mxu0
  %288 = vmatprep.mubr.f32.mxu0 0.0
  %289 = vmatmul.mubr.f32.gmra.mxu0 %v159
  %v290 = vpop.f32.mrf.mxu0
  %v291 = vadd.f32 0.0, %v290
  %v292 = vpop.f32.mrf.mxu0
  %293 = vmatprep.mubr.f32.mxu0 0.0
  %294 = vmatmul.mubr.f32.gmra.mxu0 %v162
  %v295 = vpop.f32.mrf.mxu0
  %v296 = vadd.f32 0.0, %v295
  %v297 = vpop.f32.mrf.mxu0
  %298 = vmatprep.mubr.f32.mxu0 0.0
  %299 = vmatmul.mubr.f32.gmra.mxu0 %v165
  %v300 = vpop.f32.mrf.mxu0
  %v301 = vadd.f32 0.0, %v300
  %v302 = vpop.f32.mrf.mxu0
  %303 = vmatprep.mubr.f32.mxu0 0.0
  %304 = vmatmul.mubr.f32.gmra.mxu0 %v168
  %v305 = vpop.f32.mrf.mxu0
  %v306 = vadd.f32 0.0, %v305
  %v307 = vpop.f32.mrf.mxu0
  %308 = vmatprep.mubr.f32.mxu0 0.0
  %309 = vmatmul.mubr.f32.gmra.mxu0 %v171
  %v310 = vpop.f32.mrf.mxu0
  %v311 = vadd.f32 0.0, %v310
  %v312 = vpop.f32.mrf.mxu0
  %313 = vmatprep.mubr.f32.mxu0 0.0
  %314 = vmatmul.mubr.f32.gmra.mxu0 %v174
  %v315 = vpop.f32.mrf.mxu0
  %v316 = vadd.f32 0.0, %v315
  %v317 = vpop.f32.mrf.mxu0
  %318 = vmatprep.mubr.f32.mxu0 0.0
  %319 = vmatmul.mubr.f32.gmra.mxu0 %v177
  %v320 = vpop.f32.mrf.mxu0
  %v321 = vadd.f32 0.0, %v320
  %v322 = vpop.f32.mrf.mxu0
  %323 = vmatprep.mubr.f32.mxu0 0.0
  %324 = vmatmul.mubr.f32.gmra.mxu0 %v180
  %v325 = vpop.f32.mrf.mxu0
  %v326 = vadd.f32 0.0, %v325
  %v327 = vpop.f32.mrf.mxu0
  %328 = vmatprep.mubr.f32.mxu0 0.0
  %329 = vmatmul.mubr.f32.gmra.mxu0 %v183
  %v330 = vpop.f32.mrf.mxu0
  %v331 = vadd.f32 0.0, %v330
  %v332 = vpop.f32.mrf.mxu0
  %333 = vdwg.mxu0
  %vm334 = vcmask 261120
  %335 = vst.msk [vmem:[%s2] sm:$0xff] %vm334, %v256
  %336 = vst.msk [vmem:[%s2 + $0x8] sm:$0xff] %vm334, %v261
  %337 = vst.msk [vmem:[%s2 + $0x10] sm:$0xff] %vm334, %v266
  %338 = vst.msk [vmem:[%s2 + $0x18] sm:$0xff] %vm334, %v271
  %339 = vst.msk [vmem:[%s2 + $0x20] sm:$0xff] %vm334, %v276
  %340 = vst.msk [vmem:[%s2 + $0x28] sm:$0xff] %vm334, %v281
  %341 = vst.msk [vmem:[%s2 + $0x30] sm:$0xff] %vm334, %v286
  %342 = vst.msk [vmem:[%s2 + $0x38] sm:$0xff] %vm334, %v291
  %343 = vst.msk [vmem:[%s2 + $0x40] sm:$0xff] %vm334, %v296
  %344 = vst.msk [vmem:[%s2 + $0x48] sm:$0xff] %vm334, %v301
  %345 = vst.msk [vmem:[%s2 + $0x50] sm:$0xff] %vm334, %v306
  %346 = vst.msk [vmem:[%s2 + $0x58] sm:$0xff] %vm334, %v311
  %347 = vst.msk [vmem:[%s2 + $0x60] sm:$0xff] %vm334, %v316
  %348 = vst.msk [vmem:[%s2 + $0x68] sm:$0xff] %vm334, %v321
  %349 = vst.msk [vmem:[%s2 + $0x70] sm:$0xff] %vm334, %v326
  %350 = vst.msk [vmem:[%s2 + $0x78] sm:$0xff] %vm334, %v331
  // Predicated region
  $region10: #{tpu_custom_call.1} parent=0 // pred_check
    _
  $region11: #{tpu_custom_call.1} parent=0 // pred_check_branch
    %352 = sbr.rel (0) target = $region13
  $region12: #{tpu_custom_call.1} parent=0 // pred_region
    _
  $region13: #{tpu_custom_call.1} parent=0 // pred_fallthru
    _
  // Predicated region
  $region14: #{tpu_custom_call.1} parent=0 // pred_check
    _
  $region15: #{tpu_custom_call.1} parent=0 // pred_check_branch
    %354 = sbr.rel (0) target = $region17
  $region16: #{tpu_custom_call.1} parent=0 // pred_region
    _
  $region17: #{tpu_custom_call.1} parent=0 // pred_fallthru
    _

</llo_original>
